<compile_context>
chip_gen: v5e
topology: v5e:2x2
jax: 0.10.0
libtpu: 0.0.40
codegen_flags: <defaults>
</compile_context>

<pallas_src>
import jax
import jax.numpy as jnp
from jax.experimental import pallas as pl
from jax.experimental.pallas import tpu as pltpu

FC_IN = 1024    # googlenet fc.in_features
HID = 256
OUT = 8
TN_MAX = 512    # batch-tile cap (rows per grid step)


def head_kernel(x_ref, w1_ref, b1_ref, w2_ref, b2_ref, o_ref):
    # x_ref: (TN, 1024) pooled features, bf16.  w1_ref: (1024, 256) bf16.
    # b1/b2/w2: f32.  o_ref: (TN, 8) f32 probabilities.

    # Linear(1024 -> 256): bf16 MXU inputs, f32 accumulation.
    h = jnp.dot(x_ref[...], w1_ref[...], preferred_element_type=jnp.float32)
    h = jnp.maximum(h + b1_ref[...], 0.0)            # bias + ReLU in f32

    # Linear(256 -> 8) in f32 (tiny).
    logits = jnp.dot(h, w2_ref[...], preferred_element_type=jnp.float32)
    logits = logits + b2_ref[...]

    # Softmax(dim=1), numerically stable, f32 epilogue.
    m = jnp.max(logits, axis=1, keepdims=True)
    e = jnp.exp(logits - m)
    denom = jnp.sum(e, axis=1, keepdims=True)
    o_ref[...] = (e * pl.reciprocal(denom, approx=True)).astype(o_ref.dtype)


def network_head(x_nchw, w1, b1, w2, b2):
    """x_nchw: (N, 1024, H, W) frozen-backbone feature maps (NCHW, f32)."""
    N, C, H, W = x_nchw.shape
    assert C == FC_IN

    # Backbone tail (AdaptiveAvgPool2d(1) + Flatten) hoisted into XLA: the
    # (N, 1024) result is tiny, and this removes both the relayout transpose
    # and the in-kernel spatial reduction.  Pooled activations go in as bf16.
    pooled = jnp.mean(x_nchw, axis=(2, 3)).astype(jnp.bfloat16)
    w1_bf16 = w1.astype(jnp.bfloat16)

    # Batch tile: whole batch if small, else TN_MAX-row tiles.
    TN = N if N <= TN_MAX else TN_MAX
    grid = (pl.cdiv(N, TN),)

    grid_spec = pltpu.PrefetchScalarGridSpec(
        num_scalar_prefetch=0,
        grid=grid,
        in_specs=[
            pl.BlockSpec((TN, FC_IN), lambda i: (i, 0)),      # activations
            pl.BlockSpec((FC_IN, HID), lambda i: (0, 0)),     # w1 (resident)
            pl.BlockSpec((1, HID), lambda i: (0, 0)),         # b1 (resident)
            pl.BlockSpec((HID, OUT), lambda i: (0, 0)),       # w2 (resident)
            pl.BlockSpec((1, OUT), lambda i: (0, 0)),         # b2 (resident)
        ],
        out_specs=pl.BlockSpec((TN, OUT), lambda i: (i, 0)),
    )

    return pl.pallas_call(
        head_kernel,
        out_shape=jax.ShapeDtypeStruct((N, OUT), jnp.float32),
        grid_spec=grid_spec,
        compiler_params=pltpu.CompilerParams(
            # Batch axis is independent -> shard across TensorCores on v7x.
            dimension_semantics=("parallel",)),
    )(pooled, w1_bf16, b1, w2, b2)


if __name__ == "__main__":
    key = jax.random.PRNGKey(0)
    k_x, k_w1, k_b1, k_w2, k_b2 = jax.random.split(key, 5)

    # Small shapes consistent with the module: batch=2, 1024 feature channels
    # (fixed by googlenet fc.in_features), 4x4 spatial feature map.
    N, H, W = 2, 4, 4
    x = jax.random.normal(k_x, (N, FC_IN, H, W), dtype=jnp.float32)

    # Deterministic parameter init (uniform, like nn.Linear default bounds).
    bound1 = 1.0 / (FC_IN ** 0.5)
    w1 = jax.random.uniform(k_w1, (FC_IN, HID), jnp.float32, -bound1, bound1)
    b1 = jax.random.uniform(k_b1, (1, HID), jnp.float32, -bound1, bound1)
    bound2 = 1.0 / (HID ** 0.5)
    w2 = jax.random.uniform(k_w2, (HID, OUT), jnp.float32, -bound2, bound2)
    b2 = jax.random.uniform(k_b2, (1, OUT), jnp.float32, -bound2, bound2)

    out = network_head(x, w1, b1, w2, b2)
    out = jax.block_until_ready(out)

    # Pure-JAX reference matching the kernel's bf16 matmul path.
    pooled_ref = jnp.mean(x, axis=(2, 3))
    h_ref = jnp.dot(pooled_ref.astype(jnp.bfloat16), w1.astype(jnp.bfloat16),
                    preferred_element_type=jnp.float32) + b1
    h_ref = jnp.maximum(h_ref, 0.0)
    logits_ref = jnp.dot(h_ref, w2, preferred_element_type=jnp.float32) + b2
    ref = jax.nn.softmax(logits_ref, axis=1)

    assert out.shape == (N, OUT)
    # approx reciprocal + bf16 inputs -> tolerances loosened accordingly.
    assert jnp.allclose(jnp.sum(out, axis=1), 1.0, atol=1e-2)
    assert jnp.allclose(out, ref, atol=1e-2)

    print("KERNEL_OK")
</pallas_src>

<mosaic_0001>
module attributes {stable_mosaic.version = 11 : i64} {
  func.func @head_kernel(%arg0: i32, %arg1: memref<2x1024xbf16, #tpu.memory_space<vmem>>, %arg2: memref<1024x256xbf16, #tpu.memory_space<vmem>>, %arg3: memref<1x256xf32, #tpu.memory_space<vmem>>, %arg4: memref<256x8xf32, #tpu.memory_space<vmem>>, %arg5: memref<1x8xf32, #tpu.memory_space<vmem>>, %arg6: memref<2x8xf32, #tpu.memory_space<vmem>>) attributes {dimension_semantics = [#tpu.dimension_semantics<parallel>], iteration_bounds = array<i64: 1>, scalar_prefetch = 0 : i64, scratch_operands = 0 : i64, tpu.core_type = #tpu.core_type<tc>, window_params = [{transform_indices = @transform_0, window_bounds = array<i64: 2, 1024>}, {pipeline_mode = #tpu.pipeline_mode<synchronous>, transform_indices = @transform_1, window_bounds = array<i64: 1024, 256>}, {pipeline_mode = #tpu.pipeline_mode<synchronous>, transform_indices = @transform_2, window_bounds = array<i64: 1, 256>}, {pipeline_mode = #tpu.pipeline_mode<synchronous>, transform_indices = @transform_3, window_bounds = array<i64: 256, 8>}, {pipeline_mode = #tpu.pipeline_mode<synchronous>, transform_indices = @transform_4, window_bounds = array<i64: 1, 8>}, {transform_indices = @transform_5, window_bounds = array<i64: 2, 8>}]} {
    %c0 = arith.constant 0 : index
    %c0_0 = arith.constant 0 : index
    %0 = vector.load %arg1[%c0, %c0_0] : memref<2x1024xbf16, #tpu.memory_space<vmem>>, vector<2x1024xbf16>
    %c0_1 = arith.constant 0 : index
    %c0_2 = arith.constant 0 : index
    %1 = vector.load %arg2[%c0_1, %c0_2] : memref<1024x256xbf16, #tpu.memory_space<vmem>>, vector<1024x256xbf16>
    %cst = arith.constant dense<0.000000e+00> : vector<2x256xf32>
    %2 = tpu.matmul %0, %1, %cst {dimension_numbers = #tpu.dot_dimension_numbers<[1], [0], [0], [1], [0, 0, 1, 1], [], []>} : vector<2x1024xbf16>, vector<1024x256xbf16>, vector<2x256xf32> -> vector<2x256xf32>
    %c0_3 = arith.constant 0 : index
    %c0_4 = arith.constant 0 : index
    %3 = vector.load %arg3[%c0_3, %c0_4] : memref<1x256xf32, #tpu.memory_space<vmem>>, vector<1x256xf32>
    %4 = vector.broadcast %3 : vector<1x256xf32> to vector<2x256xf32>
    %5 = arith.addf %2, %4 : vector<2x256xf32>
    %cst_5 = arith.constant 0.000000e+00 : f32
    %6 = vector.broadcast %cst_5 : f32 to vector<2x256xf32>
    %7 = arith.maximumf %5, %6 : vector<2x256xf32>
    %c0_6 = arith.constant 0 : index
    %c0_7 = arith.constant 0 : index
    %8 = vector.load %arg4[%c0_6, %c0_7] : memref<256x8xf32, #tpu.memory_space<vmem>>, vector<256x8xf32>
    %cst_8 = arith.constant dense<0.000000e+00> : vector<2x8xf32>
    %9 = tpu.matmul %7, %8, %cst_8 {dimension_numbers = #tpu.dot_dimension_numbers<[1], [0], [0], [1], [0, 0, 1, 1], [], []>} : vector<2x256xf32>, vector<256x8xf32>, vector<2x8xf32> -> vector<2x8xf32>
    %c0_9 = arith.constant 0 : index
    %c0_10 = arith.constant 0 : index
    %10 = vector.load %arg5[%c0_9, %c0_10] : memref<1x8xf32, #tpu.memory_space<vmem>>, vector<1x8xf32>
    %11 = vector.broadcast %10 : vector<1x8xf32> to vector<2x8xf32>
    %12 = arith.addf %9, %11 : vector<2x8xf32>
    %cst_11 = arith.constant dense<0xFF800000> : vector<2xf32>
    %13 = vector.multi_reduction <maximumf>, %12, %cst_11 [1] : vector<2x8xf32> to vector<2xf32>
    %14 = vector.shape_cast %13 : vector<2xf32> to vector<2x1xf32>
    %15 = vector.broadcast %14 : vector<2x1xf32> to vector<2x8xf32>
    %16 = arith.subf %12, %15 : vector<2x8xf32>
    %17 = math.exp %16 : vector<2x8xf32>
    %cst_12 = arith.constant dense<0.000000e+00> : vector<2xf32>
    %18 = vector.multi_reduction <add>, %17, %cst_12 [1] : vector<2x8xf32> to vector<2xf32>
    %19 = vector.shape_cast %18 : vector<2xf32> to vector<2x1xf32>
    %20 = tpu.reciprocal %19 {approx = true} : vector<2x1xf32> -> vector<2x1xf32>
    %21 = vector.broadcast %20 : vector<2x1xf32> to vector<2x8xf32>
    %22 = arith.mulf %17, %21 : vector<2x8xf32>
    %c0_13 = arith.constant 0 : index
    %c0_14 = arith.constant 0 : index
    %23 = vector.load %arg6[%c0_13, %c0_14] : memref<2x8xf32, #tpu.memory_space<vmem>>, vector<2x8xf32>
    tpu.vector_store %arg6[%c0_13, %c0_14], %22 {strides = array<i32>} : memref<2x8xf32, #tpu.memory_space<vmem>>, vector<2x8xf32>,
    return
  }
  func.func @transform_0(%arg0: i32) -> (i32, i32) {
    %c0_i32 = arith.constant 0 : i32
    %c0_i32_0 = arith.constant 0 : i32
    return %arg0, %c0_i32 : i32, i32
  }
  func.func @transform_1(%arg0: i32) -> (i32, i32) {
    %c0_i32 = arith.constant 0 : i32
    %c0_i32_0 = arith.constant 0 : i32
    %c0_i32_1 = arith.constant 0 : i32
    return %c0_i32, %c0_i32_0 : i32, i32
  }
  func.func @transform_2(%arg0: i32) -> (i32, i32) {
    %c0_i32 = arith.constant 0 : i32
    %c0_i32_0 = arith.constant 0 : i32
    %c0_i32_1 = arith.constant 0 : i32
    return %c0_i32, %c0_i32_0 : i32, i32
  }
  func.func @transform_3(%arg0: i32) -> (i32, i32) {
    %c0_i32 = arith.constant 0 : i32
    %c0_i32_0 = arith.constant 0 : i32
    %c0_i32_1 = arith.constant 0 : i32
    return %c0_i32, %c0_i32_0 : i32, i32
  }
  func.func @transform_4(%arg0: i32) -> (i32, i32) {
    %c0_i32 = arith.constant 0 : i32
    %c0_i32_0 = arith.constant 0 : i32
    %c0_i32_1 = arith.constant 0 : i32
    return %c0_i32, %c0_i32_0 : i32, i32
  }
  func.func @transform_5(%arg0: i32) -> (i32, i32) {
    %c0_i32 = arith.constant 0 : i32
    %c0_i32_0 = arith.constant 0 : i32
    return %arg0, %c0_i32 : i32, i32
  }
}

</mosaic_0001>

<llo_original>
// kernel: tpu_custom_call.1
$region0: #{tpu_custom_call.1}
  #allocation0 [shape = 'u32[]', space=smem, size = 0x4, offset = 0x4, fixed_abs, tag = 'smem constant byte address 0x4 - core index']
  #allocation1 [shape = 'u32[72,128]{1,0:T(1,128)}', space=vmem, size = 0x9000, scoped, tag = 'internal scratch']
  %s0 = inlined_call_operand.vmem [shape: bf16[2,1024], index: 0, kind: input, shape index: {}]
  %s1 = inlined_call_operand.hbm [shape: bf16[1024,256], index: 1, kind: input, shape index: {}]
  %s2 = inlined_call_operand.vmem [shape: f32[1,256], index: 2, kind: input, shape index: {}]
  %s3 = inlined_call_operand.vmem [shape: f32[256,8], index: 3, kind: input, shape index: {}]
  %s4 = inlined_call_operand.vmem [shape: f32[1,8], index: 4, kind: input, shape index: {}]
  %s5 = inlined_call_operand.hbm [shape: f32[2,8], index: 5, kind: output, shape index: {}]
  %s6 = sld [smem:[#allocation0]]
  $region34: #{tpu_custom_call.1} parent=0
    _
  %s8 = ssub.s32 1, %s6
  %s9 = scalar_select 0, %s8, %s6
  $region1: #{tpu_custom_call.1} parent=0
    #allocation2 [shape = 'u8[524288]{0}', space=vmem, size = 0x80000, scoped, tag = 'input window, operand 1, single buffered']
    #allocation3 [shape = 's32[1]{0}', space=sflag, size = 0x4, scoped, tag = 'scoped memory for tpu_custom_call.1']
    #allocation4 [shape = 's32[1]{0}', space=sflag, size = 0x4, scoped, tag = 'scoped memory for tpu_custom_call.1']
    #allocation5 [shape = 'u8[1024]{0}', space=vmem, size = 0x400, scoped, tag = 'output window, operand 0, single buffered']
    %10 = vsyncpa [#allocation3], 0
    %11 = vsyncpa [#allocation4], 0
    // Predicated region
    $region2: #{tpu_custom_call.1} parent=1 // pred_check
      _
    $region3: #{tpu_custom_call.1} parent=1 // pred_check_branch
      %13 = sbr.rel (0) target = $region5
    $region4: #{tpu_custom_call.1} parent=1 // pred_region
      _
    $region5: #{tpu_custom_call.1} parent=1 // pred_fallthru
      _
    // Predicated region
    $region6: #{tpu_custom_call.1} parent=1 // pred_check
      _
    $region7: #{tpu_custom_call.1} parent=1 // pred_check_branch
      %15 = sbr.rel (0) target = $region9
    $region8: #{tpu_custom_call.1} parent=1 // pred_region
      %17 = vsyncadd [#allocation3], 0
      %s18 = sshll.u32 %s1, 4
      %s19 = int_to_ptr.hbm [resolvable:$true] %s18
      %s20 = sshll.u32 [#allocation2], 4
      %s21 = int_to_ptr.vmem [resolvable:$true] %s20
      %26 = dma.hbm_to_vmem [thread:$0]  %s19, 16384, %s21, [#allocation3], 128, 128, 8
    $region9: #{tpu_custom_call.1} parent=1 // pred_fallthru
      _
    // Predicated region
    $region10: #{tpu_custom_call.1} parent=1 // pred_check
      _
    $region11: #{tpu_custom_call.1} parent=1 // pred_check_branch
      %28 = sbr.rel (0) target = $region13
    $region12: #{tpu_custom_call.1} parent=1 // pred_region
      _
    $region13: #{tpu_custom_call.1} parent=1 // pred_fallthru
      _
    // Predicated region
    $region14: #{tpu_custom_call.1} parent=1 // pred_check
      _
    $region15: #{tpu_custom_call.1} parent=1 // pred_check_branch
      %30 = sbr.rel (0) target = $region17
    $region16: #{tpu_custom_call.1} parent=1 // pred_region
      _
    $region17: #{tpu_custom_call.1} parent=1 // pred_fallthru
      _
    // Predicated region
    $region18: #{tpu_custom_call.1} parent=1 // pred_check
      _
    $region19: #{tpu_custom_call.1} parent=1 // pred_check_branch
      %32 = sbr.rel (0) target = $region21
    $region20: #{tpu_custom_call.1} parent=1 // pred_region
      _
    $region21: #{tpu_custom_call.1} parent=1 // pred_fallthru
      _
    // Predicated region
    $region22: #{tpu_custom_call.1} parent=1 // pred_check
      _
    $region23: #{tpu_custom_call.1} parent=1 // pred_check_branch
      %34 = sbr.rel (0) target = $region25
    $region24: #{tpu_custom_call.1} parent=1 // pred_region
      %36 = dma.done [#allocation3], 16384
    $region25: #{tpu_custom_call.1} parent=1 // pred_fallthru
      _
    %v37 = vld [vmem:[%s0] sm:$0xff]
    %v38 = vld [vmem:[#allocation2] sm:$0xff]
    %v39 = vld [vmem:[#allocation2 + $0x8] sm:$0xff]
    %v40 = vld [vmem:[#allocation2 + $0x10] sm:$0xff]
    %v41 = vld [vmem:[#allocation2 + $0x18] sm:$0xff]
    %v42 = vld [vmem:[#allocation2 + $0x20] sm:$0xff]
    %v43 = vld [vmem:[#allocation2 + $0x28] sm:$0xff]
    %v44 = vld [vmem:[#allocation2 + $0x30] sm:$0xff]
    %v45 = vld [vmem:[#allocation2 + $0x38] sm:$0xff]
    %v46 = vld [vmem:[#allocation2 + $0x40] sm:$0xff]
    %v47 = vld [vmem:[#allocation2 + $0x48] sm:$0xff]
    %v48 = vld [vmem:[#allocation2 + $0x50] sm:$0xff]
    %v49 = vld [vmem:[#allocation2 + $0x58] sm:$0xff]
    %v50 = vld [vmem:[#allocation2 + $0x60] sm:$0xff]
    %v51 = vld [vmem:[#allocation2 + $0x68] sm:$0xff]
    %v52 = vld [vmem:[#allocation2 + $0x70] sm:$0xff]
    %v53 = vld [vmem:[#allocation2 + $0x78] sm:$0xff]
    %v54 = vld [vmem:[#allocation2 + $0x80] sm:$0xff]
    %v55 = vld [vmem:[#allocation2 + $0x88] sm:$0xff]
    %v56 = vld [vmem:[#allocation2 + $0x90] sm:$0xff]
    %v57 = vld [vmem:[#allocation2 + $0x98] sm:$0xff]
    %v58 = vld [vmem:[#allocation2 + $0xa0] sm:$0xff]
    %v59 = vld [vmem:[#allocation2 + $0xa8] sm:$0xff]
    %v60 = vld [vmem:[#allocation2 + $0xb0] sm:$0xff]
    %v61 = vld [vmem:[#allocation2 + $0xb8] sm:$0xff]
    %v62 = vld [vmem:[#allocation2 + $0xc0] sm:$0xff]
    %v63 = vld [vmem:[#allocation2 + $0xc8] sm:$0xff]
    %v64 = vld [vmem:[#allocation2 + $0xd0] sm:$0xff]
    %v65 = vld [vmem:[#allocation2 + $0xd8] sm:$0xff]
    %v66 = vld [vmem:[#allocation2 + $0xe0] sm:$0xff]
    %v67 = vld [vmem:[#allocation2 + $0xe8] sm:$0xff]
    %v68 = vld [vmem:[#allocation2 + $0xf0] sm:$0xff]
    %v69 = vld [vmem:[#allocation2 + $0xf8] sm:$0xff]
    %v70 = vld [vmem:[#allocation2 + $0x100] sm:$0xff]
    %v71 = vld [vmem:[#allocation2 + $0x108] sm:$0xff]
    %v72 = vld [vmem:[#allocation2 + $0x110] sm:$0xff]
    %v73 = vld [vmem:[#allocation2 + $0x118] sm:$0xff]
    %v74 = vld [vmem:[#allocation2 + $0x120] sm:$0xff]
    %v75 = vld [vmem:[#allocation2 + $0x128] sm:$0xff]
    %v76 = vld [vmem:[#allocation2 + $0x130] sm:$0xff]
    %v77 = vld [vmem:[#allocation2 + $0x138] sm:$0xff]
    %v78 = vld [vmem:[#allocation2 + $0x140] sm:$0xff]
    %v79 = vld [vmem:[#allocation2 + $0x148] sm:$0xff]
    %v80 = vld [vmem:[#allocation2 + $0x150] sm:$0xff]
    %v81 = vld [vmem:[#allocation2 + $0x158] sm:$0xff]
    %v82 = vld [vmem:[#allocation2 + $0x160] sm:$0xff]
    %v83 = vld [vmem:[#allocation2 + $0x168] sm:$0xff]
    %v84 = vld [vmem:[#allocation2 + $0x170] sm:$0xff]
    %v85 = vld [vmem:[#allocation2 + $0x178] sm:$0xff]
    %v86 = vld [vmem:[#allocation2 + $0x180] sm:$0xff]
    %v87 = vld [vmem:[#allocation2 + $0x188] sm:$0xff]
    %v88 = vld [vmem:[#allocation2 + $0x190] sm:$0xff]
    %v89 = vld [vmem:[#allocation2 + $0x198] sm:$0xff]
    %v90 = vld [vmem:[#allocation2 + $0x1a0] sm:$0xff]
    %v91 = vld [vmem:[#allocation2 + $0x1a8] sm:$0xff]
    %v92 = vld [vmem:[#allocation2 + $0x1b0] sm:$0xff]
    %v93 = vld [vmem:[#allocation2 + $0x1b8] sm:$0xff]
    %v94 = vld [vmem:[#allocation2 + $0x1c0] sm:$0xff]
    %v95 = vld [vmem:[#allocation2 + $0x1c8] sm:$0xff]
    %v96 = vld [vmem:[#allocation2 + $0x1d0] sm:$0xff]
    %v97 = vld [vmem:[#allocation2 + $0x1d8] sm:$0xff]
    %v98 = vld [vmem:[#allocation2 + $0x1e0] sm:$0xff]
    %v99 = vld [vmem:[#allocation2 + $0x1e8] sm:$0xff]
    %v100 = vld [vmem:[#allocation2 + $0x1f0] sm:$0xff]
    %v101 = vld [vmem:[#allocation2 + $0x1f8] sm:$0xff]
    %v102 = vld [vmem:[#allocation2 + $0x200] sm:$0xff]
    %v103 = vld [vmem:[#allocation2 + $0x208] sm:$0xff]
    %v104 = vld [vmem:[#allocation2 + $0x210] sm:$0xff]
    %v105 = vld [vmem:[#allocation2 + $0x218] sm:$0xff]
    %v106 = vld [vmem:[#allocation2 + $0x220] sm:$0xff]
    %v107 = vld [vmem:[#allocation2 + $0x228] sm:$0xff]
    %v108 = vld [vmem:[#allocation2 + $0x230] sm:$0xff]
    %v109 = vld [vmem:[#allocation2 + $0x238] sm:$0xff]
    %v110 = vld [vmem:[#allocation2 + $0x240] sm:$0xff]
    %v111 = vld [vmem:[#allocation2 + $0x248] sm:$0xff]
    %v112 = vld [vmem:[#allocation2 + $0x250] sm:$0xff]
    %v113 = vld [vmem:[#allocation2 + $0x258] sm:$0xff]
    %v114 = vld [vmem:[#allocation2 + $0x260] sm:$0xff]
    %v115 = vld [vmem:[#allocation2 + $0x268] sm:$0xff]
    %v116 = vld [vmem:[#allocation2 + $0x270] sm:$0xff]
    %v117 = vld [vmem:[#allocation2 + $0x278] sm:$0xff]
    %v118 = vld [vmem:[#allocation2 + $0x280] sm:$0xff]
    %v119 = vld [vmem:[#allocation2 + $0x288] sm:$0xff]
    %v120 = vld [vmem:[#allocation2 + $0x290] sm:$0xff]
    %v121 = vld [vmem:[#allocation2 + $0x298] sm:$0xff]
    %v122 = vld [vmem:[#allocation2 + $0x2a0] sm:$0xff]
    %v123 = vld [vmem:[#allocation2 + $0x2a8] sm:$0xff]
    %v124 = vld [vmem:[#allocation2 + $0x2b0] sm:$0xff]
    %v125 = vld [vmem:[#allocation2 + $0x2b8] sm:$0xff]
    %v126 = vld [vmem:[#allocation2 + $0x2c0] sm:$0xff]
    %v127 = vld [vmem:[#allocation2 + $0x2c8] sm:$0xff]
    %v128 = vld [vmem:[#allocation2 + $0x2d0] sm:$0xff]
    %v129 = vld [vmem:[#allocation2 + $0x2d8] sm:$0xff]
    %v130 = vld [vmem:[#allocation2 + $0x2e0] sm:$0xff]
    %v131 = vld [vmem:[#allocation2 + $0x2e8] sm:$0xff]
    %v132 = vld [vmem:[#allocation2 + $0x2f0] sm:$0xff]
    %v133 = vld [vmem:[#allocation2 + $0x2f8] sm:$0xff]
    %v134 = vld [vmem:[#allocation2 + $0x300] sm:$0xff]
    %v135 = vld [vmem:[#allocation2 + $0x308] sm:$0xff]
    %v136 = vld [vmem:[#allocation2 + $0x310] sm:$0xff]
    %v137 = vld [vmem:[#allocation2 + $0x318] sm:$0xff]
    %v138 = vld [vmem:[#allocation2 + $0x320] sm:$0xff]
    %v139 = vld [vmem:[#allocation2 + $0x328] sm:$0xff]
    %v140 = vld [vmem:[#allocation2 + $0x330] sm:$0xff]
    %v141 = vld [vmem:[#allocation2 + $0x338] sm:$0xff]
    %v142 = vld [vmem:[#allocation2 + $0x340] sm:$0xff]
    %v143 = vld [vmem:[#allocation2 + $0x348] sm:$0xff]
    %v144 = vld [vmem:[#allocation2 + $0x350] sm:$0xff]
    %v145 = vld [vmem:[#allocation2 + $0x358] sm:$0xff]
    %v146 = vld [vmem:[#allocation2 + $0x360] sm:$0xff]
    %v147 = vld [vmem:[#allocation2 + $0x368] sm:$0xff]
    %v148 = vld [vmem:[#allocation2 + $0x370] sm:$0xff]
    %v149 = vld [vmem:[#allocation2 + $0x378] sm:$0xff]
    %v150 = vld [vmem:[#allocation2 + $0x380] sm:$0xff]
    %v151 = vld [vmem:[#allocation2 + $0x388] sm:$0xff]
    %v152 = vld [vmem:[#allocation2 + $0x390] sm:$0xff]
    %v153 = vld [vmem:[#allocation2 + $0x398] sm:$0xff]
    %v154 = vld [vmem:[#allocation2 + $0x3a0] sm:$0xff]
    %v155 = vld [vmem:[#allocation2 + $0x3a8] sm:$0xff]
    %v156 = vld [vmem:[#allocation2 + $0x3b0] sm:$0xff]
    %v157 = vld [vmem:[#allocation2 + $0x3b8] sm:$0xff]
    %v158 = vld [vmem:[#allocation2 + $0x3c0] sm:$0xff]
    %v159 = vld [vmem:[#allocation2 + $0x3c8] sm:$0xff]
    %v160 = vld [vmem:[#allocation2 + $0x3d0] sm:$0xff]
    %v161 = vld [vmem:[#allocation2 + $0x3d8] sm:$0xff]
    %v162 = vld [vmem:[#allocation2 + $0x3e0] sm:$0xff]
    %v163 = vld [vmem:[#allocation2 + $0x3e8] sm:$0xff]
    %v164 = vld [vmem:[#allocation2 + $0x3f0] sm:$0xff]
    %v165 = vld [vmem:[#allocation2 + $0x3f8] sm:$0xff]
    %v166 = vld [vmem:[%s2] sm:$0x3]
    %v168 = vperm.slane %v166, 0
    %v169 = vperm.slane %v166, 1
    %173 = vst [vmem:[#allocation1] ss:$9 sm:$0xff] %v37
    %v174 = vld [vmem:[#allocation1] sm:$0xff]
    %v175 = vld [vmem:[#allocation1 + $0x9] sm:$0xff]
    %v176 = vld [vmem:[#allocation1 + $0x12] sm:$0xff]
    %v177 = vld [vmem:[#allocation1 + $0x1b] sm:$0xff]
    %v178 = vld [vmem:[#allocation1 + $0x24] sm:$0xff]
    %v179 = vld [vmem:[#allocation1 + $0x2d] sm:$0xff]
    %v180 = vld [vmem:[#allocation1 + $0x36] sm:$0xff]
    %v181 = vld [vmem:[#allocation1 + $0x3f] sm:$0xff]
    %v318 = vunpack.c.l.b16 %v38
    %v319 = vunpack.c.h.b16 %v38
    %v320 = vunpack.c.l.b16 %v39
    %v321 = vunpack.c.h.b16 %v39
    %v322 = vunpack.c.l.b16 %v40
    %v323 = vunpack.c.h.b16 %v40
    %v324 = vunpack.c.l.b16 %v41
    %v325 = vunpack.c.h.b16 %v41
    %v326 = vunpack.c.l.b16 %v42
    %v327 = vunpack.c.h.b16 %v42
    %v328 = vunpack.c.l.b16 %v43
    %v329 = vunpack.c.h.b16 %v43
    %v330 = vunpack.c.l.b16 %v44
    %v331 = vunpack.c.h.b16 %v44
    %v332 = vunpack.c.l.b16 %v45
    %v333 = vunpack.c.h.b16 %v45
    %v334 = vunpack.c.l.b16 %v46
    %v335 = vunpack.c.h.b16 %v46
    %v336 = vunpack.c.l.b16 %v47
    %v337 = vunpack.c.h.b16 %v47
    %v338 = vunpack.c.l.b16 %v48
    %v339 = vunpack.c.h.b16 %v48
    %v340 = vunpack.c.l.b16 %v49
    %v341 = vunpack.c.h.b16 %v49
    %v342 = vunpack.c.l.b16 %v50
    %v343 = vunpack.c.h.b16 %v50
    %v344 = vunpack.c.l.b16 %v51
    %v345 = vunpack.c.h.b16 %v51
    %v346 = vunpack.c.l.b16 %v52
    %v347 = vunpack.c.h.b16 %v52
    %v348 = vunpack.c.l.b16 %v53
    %v349 = vunpack.c.h.b16 %v53
    %v350 = vunpack.c.l.b16 %v54
    %v351 = vunpack.c.h.b16 %v54
    %v352 = vunpack.c.l.b16 %v55
    %v353 = vunpack.c.h.b16 %v55
    %v354 = vunpack.c.l.b16 %v56
    %v355 = vunpack.c.h.b16 %v56
    %v356 = vunpack.c.l.b16 %v57
    %v357 = vunpack.c.h.b16 %v57
    %v358 = vunpack.c.l.b16 %v58
    %v359 = vunpack.c.h.b16 %v58
    %v360 = vunpack.c.l.b16 %v59
    %v361 = vunpack.c.h.b16 %v59
    %v362 = vunpack.c.l.b16 %v60
    %v363 = vunpack.c.h.b16 %v60
    %v364 = vunpack.c.l.b16 %v61
    %v365 = vunpack.c.h.b16 %v61
    %v366 = vunpack.c.l.b16 %v62
    %v367 = vunpack.c.h.b16 %v62
    %v368 = vunpack.c.l.b16 %v63
    %v369 = vunpack.c.h.b16 %v63
    %v370 = vunpack.c.l.b16 %v64
    %v371 = vunpack.c.h.b16 %v64
    %v372 = vunpack.c.l.b16 %v65
    %v373 = vunpack.c.h.b16 %v65
    %v374 = vunpack.c.l.b16 %v66
    %v375 = vunpack.c.h.b16 %v66
    %v376 = vunpack.c.l.b16 %v67
    %v377 = vunpack.c.h.b16 %v67
    %v378 = vunpack.c.l.b16 %v68
    %v379 = vunpack.c.h.b16 %v68
    %v380 = vunpack.c.l.b16 %v69
    %v381 = vunpack.c.h.b16 %v69
    %v382 = vunpack.c.l.b16 %v70
    %v383 = vunpack.c.h.b16 %v70
    %v384 = vunpack.c.l.b16 %v71
    %v385 = vunpack.c.h.b16 %v71
    %v386 = vunpack.c.l.b16 %v72
    %v387 = vunpack.c.h.b16 %v72
    %v388 = vunpack.c.l.b16 %v73
    %v389 = vunpack.c.h.b16 %v73
    %v390 = vunpack.c.l.b16 %v74
    %v391 = vunpack.c.h.b16 %v74
    %v392 = vunpack.c.l.b16 %v75
    %v393 = vunpack.c.h.b16 %v75
    %v394 = vunpack.c.l.b16 %v76
    %v395 = vunpack.c.h.b16 %v76
    %v396 = vunpack.c.l.b16 %v77
    %v397 = vunpack.c.h.b16 %v77
    %v398 = vunpack.c.l.b16 %v78
    %v399 = vunpack.c.h.b16 %v78
    %v400 = vunpack.c.l.b16 %v79
    %v401 = vunpack.c.h.b16 %v79
    %v402 = vunpack.c.l.b16 %v80
    %v403 = vunpack.c.h.b16 %v80
    %v404 = vunpack.c.l.b16 %v81
    %v405 = vunpack.c.h.b16 %v81
    %v406 = vunpack.c.l.b16 %v82
    %v407 = vunpack.c.h.b16 %v82
    %v408 = vunpack.c.l.b16 %v83
    %v409 = vunpack.c.h.b16 %v83
    %v410 = vunpack.c.l.b16 %v84
    %v411 = vunpack.c.h.b16 %v84
    %v412 = vunpack.c.l.b16 %v85
    %v413 = vunpack.c.h.b16 %v85
    %v414 = vunpack.c.l.b16 %v86
    %v415 = vunpack.c.h.b16 %v86
    %v416 = vunpack.c.l.b16 %v87
    %v417 = vunpack.c.h.b16 %v87
    %v418 = vunpack.c.l.b16 %v88
    %v419 = vunpack.c.h.b16 %v88
    %v420 = vunpack.c.l.b16 %v89
    %v421 = vunpack.c.h.b16 %v89
    %v422 = vunpack.c.l.b16 %v90
    %v423 = vunpack.c.h.b16 %v90
    %v424 = vunpack.c.l.b16 %v91
    %v425 = vunpack.c.h.b16 %v91
    %v426 = vunpack.c.l.b16 %v92
    %v427 = vunpack.c.h.b16 %v92
    %v428 = vunpack.c.l.b16 %v93
    %v429 = vunpack.c.h.b16 %v93
    %v430 = vunpack.c.l.b16 %v94
    %v431 = vunpack.c.h.b16 %v94
    %v432 = vunpack.c.l.b16 %v95
    %v433 = vunpack.c.h.b16 %v95
    %v434 = vunpack.c.l.b16 %v96
    %v435 = vunpack.c.h.b16 %v96
    %v436 = vunpack.c.l.b16 %v97
    %v437 = vunpack.c.h.b16 %v97
    %v438 = vunpack.c.l.b16 %v98
    %v439 = vunpack.c.h.b16 %v98
    %v440 = vunpack.c.l.b16 %v99
    %v441 = vunpack.c.h.b16 %v99
    %v442 = vunpack.c.l.b16 %v100
    %v443 = vunpack.c.h.b16 %v100
    %v444 = vunpack.c.l.b16 %v101
    %v445 = vunpack.c.h.b16 %v101
    %v446 = vunpack.c.l.b16 %v102
    %v447 = vunpack.c.h.b16 %v102
    %v448 = vunpack.c.l.b16 %v103
    %v449 = vunpack.c.h.b16 %v103
    %v450 = vunpack.c.l.b16 %v104
    %v451 = vunpack.c.h.b16 %v104
    %v452 = vunpack.c.l.b16 %v105
    %v453 = vunpack.c.h.b16 %v105
    %v454 = vunpack.c.l.b16 %v106
    %v455 = vunpack.c.h.b16 %v106
    %v456 = vunpack.c.l.b16 %v107
    %v457 = vunpack.c.h.b16 %v107
    %v458 = vunpack.c.l.b16 %v108
    %v459 = vunpack.c.h.b16 %v108
    %v460 = vunpack.c.l.b16 %v109
    %v461 = vunpack.c.h.b16 %v109
    %v462 = vunpack.c.l.b16 %v110
    %v463 = vunpack.c.h.b16 %v110
    %v464 = vunpack.c.l.b16 %v111
    %v465 = vunpack.c.h.b16 %v111
    %v466 = vunpack.c.l.b16 %v112
    %v467 = vunpack.c.h.b16 %v112
    %v468 = vunpack.c.l.b16 %v113
    %v469 = vunpack.c.h.b16 %v113
    %v470 = vunpack.c.l.b16 %v114
    %v471 = vunpack.c.h.b16 %v114
    %v472 = vunpack.c.l.b16 %v115
    %v473 = vunpack.c.h.b16 %v115
    %v474 = vunpack.c.l.b16 %v116
    %v475 = vunpack.c.h.b16 %v116
    %v476 = vunpack.c.l.b16 %v117
    %v477 = vunpack.c.h.b16 %v117
    %v478 = vunpack.c.l.b16 %v118
    %v479 = vunpack.c.h.b16 %v118
    %v480 = vunpack.c.l.b16 %v119
    %v481 = vunpack.c.h.b16 %v119
    %v482 = vunpack.c.l.b16 %v120
    %v483 = vunpack.c.h.b16 %v120
    %v484 = vunpack.c.l.b16 %v121
    %v485 = vunpack.c.h.b16 %v121
    %v486 = vunpack.c.l.b16 %v122
    %v487 = vunpack.c.h.b16 %v122
    %v488 = vunpack.c.l.b16 %v123
    %v489 = vunpack.c.h.b16 %v123
    %v490 = vunpack.c.l.b16 %v124
    %v491 = vunpack.c.h.b16 %v124
    %v492 = vunpack.c.l.b16 %v125
    %v493 = vunpack.c.h.b16 %v125
    %v494 = vunpack.c.l.b16 %v126
    %v495 = vunpack.c.h.b16 %v126
    %v496 = vunpack.c.l.b16 %v127
    %v497 = vunpack.c.h.b16 %v127
    %v498 = vunpack.c.l.b16 %v128
    %v499 = vunpack.c.h.b16 %v128
    %v500 = vunpack.c.l.b16 %v129
    %v501 = vunpack.c.h.b16 %v129
    %v502 = vunpack.c.l.b16 %v130
    %v503 = vunpack.c.h.b16 %v130
    %v504 = vunpack.c.l.b16 %v131
    %v505 = vunpack.c.h.b16 %v131
    %v506 = vunpack.c.l.b16 %v132
    %v507 = vunpack.c.h.b16 %v132
    %v508 = vunpack.c.l.b16 %v133
    %v509 = vunpack.c.h.b16 %v133
    %v510 = vunpack.c.l.b16 %v134
    %v511 = vunpack.c.h.b16 %v134
    %v512 = vunpack.c.l.b16 %v135
    %v513 = vunpack.c.h.b16 %v135
    %v514 = vunpack.c.l.b16 %v136
    %v515 = vunpack.c.h.b16 %v136
    %v516 = vunpack.c.l.b16 %v137
    %v517 = vunpack.c.h.b16 %v137
    %v518 = vunpack.c.l.b16 %v138
    %v519 = vunpack.c.h.b16 %v138
    %v520 = vunpack.c.l.b16 %v139
    %v521 = vunpack.c.h.b16 %v139
    %v522 = vunpack.c.l.b16 %v140
    %v523 = vunpack.c.h.b16 %v140
    %v524 = vunpack.c.l.b16 %v141
    %v525 = vunpack.c.h.b16 %v141
    %v526 = vunpack.c.l.b16 %v142
    %v527 = vunpack.c.h.b16 %v142
    %v528 = vunpack.c.l.b16 %v143
    %v529 = vunpack.c.h.b16 %v143
    %v530 = vunpack.c.l.b16 %v144
    %v531 = vunpack.c.h.b16 %v144
    %v532 = vunpack.c.l.b16 %v145
    %v533 = vunpack.c.h.b16 %v145
    %v534 = vunpack.c.l.b16 %v146
    %v535 = vunpack.c.h.b16 %v146
    %v536 = vunpack.c.l.b16 %v147
    %v537 = vunpack.c.h.b16 %v147
    %v538 = vunpack.c.l.b16 %v148
    %v539 = vunpack.c.h.b16 %v148
    %v540 = vunpack.c.l.b16 %v149
    %v541 = vunpack.c.h.b16 %v149
    %v542 = vunpack.c.l.b16 %v150
    %v543 = vunpack.c.h.b16 %v150
    %v544 = vunpack.c.l.b16 %v151
    %v545 = vunpack.c.h.b16 %v151
    %v546 = vunpack.c.l.b16 %v152
    %v547 = vunpack.c.h.b16 %v152
    %v548 = vunpack.c.l.b16 %v153
    %v549 = vunpack.c.h.b16 %v153
    %v550 = vunpack.c.l.b16 %v154
    %v551 = vunpack.c.h.b16 %v154
    %v552 = vunpack.c.l.b16 %v155
    %v553 = vunpack.c.h.b16 %v155
    %v554 = vunpack.c.l.b16 %v156
    %v555 = vunpack.c.h.b16 %v156
    %v556 = vunpack.c.l.b16 %v157
    %v557 = vunpack.c.h.b16 %v157
    %v558 = vunpack.c.l.b16 %v158
    %v559 = vunpack.c.h.b16 %v158
    %v560 = vunpack.c.l.b16 %v159
    %v561 = vunpack.c.h.b16 %v159
    %v562 = vunpack.c.l.b16 %v160
    %v563 = vunpack.c.h.b16 %v160
    %v564 = vunpack.c.l.b16 %v161
    %v565 = vunpack.c.h.b16 %v161
    %v566 = vunpack.c.l.b16 %v162
    %v567 = vunpack.c.h.b16 %v162
    %v568 = vunpack.c.l.b16 %v163
    %v569 = vunpack.c.h.b16 %v163
    %v570 = vunpack.c.l.b16 %v164
    %v571 = vunpack.c.h.b16 %v164
    %v572 = vunpack.c.l.b16 %v165
    %v573 = vunpack.c.h.b16 %v165
    %v574 = vpack.c.b16 %v320, %v318
    %v575 = vpack.c.b16 %v321, %v319
    %v576 = vpack.c.b16 %v324, %v322
    %v577 = vpack.c.b16 %v325, %v323
    %v578 = vpack.c.b16 %v328, %v326
    %v579 = vpack.c.b16 %v329, %v327
    %v580 = vpack.c.b16 %v332, %v330
    %v581 = vpack.c.b16 %v333, %v331
    %v582 = vpack.c.b16 %v336, %v334
    %v583 = vpack.c.b16 %v337, %v335
    %v584 = vpack.c.b16 %v340, %v338
    %v585 = vpack.c.b16 %v341, %v339
    %v586 = vpack.c.b16 %v344, %v342
    %v587 = vpack.c.b16 %v345, %v343
    %v588 = vpack.c.b16 %v348, %v346
    %v589 = vpack.c.b16 %v349, %v347
    %v590 = vpack.c.b16 %v352, %v350
    %v591 = vpack.c.b16 %v353, %v351
    %v592 = vpack.c.b16 %v356, %v354
    %v593 = vpack.c.b16 %v357, %v355
    %v594 = vpack.c.b16 %v360, %v358
    %v595 = vpack.c.b16 %v361, %v359
    %v596 = vpack.c.b16 %v364, %v362
    %v597 = vpack.c.b16 %v365, %v363
    %v598 = vpack.c.b16 %v368, %v366
    %v599 = vpack.c.b16 %v369, %v367
    %v600 = vpack.c.b16 %v372, %v370
    %v601 = vpack.c.b16 %v373, %v371
    %v602 = vpack.c.b16 %v376, %v374
    %v603 = vpack.c.b16 %v377, %v375
    %v604 = vpack.c.b16 %v380, %v378
    %v605 = vpack.c.b16 %v381, %v379
    %v606 = vpack.c.b16 %v384, %v382
    %v607 = vpack.c.b16 %v385, %v383
    %v608 = vpack.c.b16 %v388, %v386
    %v609 = vpack.c.b16 %v389, %v387
    %v610 = vpack.c.b16 %v392, %v390
    %v611 = vpack.c.b16 %v393, %v391
    %v612 = vpack.c.b16 %v396, %v394
    %v613 = vpack.c.b16 %v397, %v395
    %v614 = vpack.c.b16 %v400, %v398
    %v615 = vpack.c.b16 %v401, %v399
    %v616 = vpack.c.b16 %v404, %v402
    %v617 = vpack.c.b16 %v405, %v403
    %v618 = vpack.c.b16 %v408, %v406
    %v619 = vpack.c.b16 %v409, %v407
    %v620 = vpack.c.b16 %v412, %v410
    %v621 = vpack.c.b16 %v413, %v411
    %v622 = vpack.c.b16 %v416, %v414
    %v623 = vpack.c.b16 %v417, %v415
    %v624 = vpack.c.b16 %v420, %v418
    %v625 = vpack.c.b16 %v421, %v419
    %v626 = vpack.c.b16 %v424, %v422
    %v627 = vpack.c.b16 %v425, %v423
    %v628 = vpack.c.b16 %v428, %v426
    %v629 = vpack.c.b16 %v429, %v427
    %v630 = vpack.c.b16 %v432, %v430
    %v631 = vpack.c.b16 %v433, %v431
    %v632 = vpack.c.b16 %v436, %v434
    %v633 = vpack.c.b16 %v437, %v435
    %v634 = vpack.c.b16 %v440, %v438
    %v635 = vpack.c.b16 %v441, %v439
    %v636 = vpack.c.b16 %v444, %v442
    %v637 = vpack.c.b16 %v445, %v443
    %v638 = vpack.c.b16 %v448, %v446
    %v639 = vpack.c.b16 %v449, %v447
    %v640 = vpack.c.b16 %v452, %v450
    %v641 = vpack.c.b16 %v453, %v451
    %v642 = vpack.c.b16 %v456, %v454
    %v643 = vpack.c.b16 %v457, %v455
    %v644 = vpack.c.b16 %v460, %v458
    %v645 = vpack.c.b16 %v461, %v459
    %v646 = vpack.c.b16 %v464, %v462
    %v647 = vpack.c.b16 %v465, %v463
    %v648 = vpack.c.b16 %v468, %v466
    %v649 = vpack.c.b16 %v469, %v467
    %v650 = vpack.c.b16 %v472, %v470
    %v651 = vpack.c.b16 %v473, %v471
    %v652 = vpack.c.b16 %v476, %v474
    %v653 = vpack.c.b16 %v477, %v475
    %v654 = vpack.c.b16 %v480, %v478
    %v655 = vpack.c.b16 %v481, %v479
    %v656 = vpack.c.b16 %v484, %v482
    %v657 = vpack.c.b16 %v485, %v483
    %v658 = vpack.c.b16 %v488, %v486
    %v659 = vpack.c.b16 %v489, %v487
    %v660 = vpack.c.b16 %v492, %v490
    %v661 = vpack.c.b16 %v493, %v491
    %v662 = vpack.c.b16 %v496, %v494
    %v663 = vpack.c.b16 %v497, %v495
    %v664 = vpack.c.b16 %v500, %v498
    %v665 = vpack.c.b16 %v501, %v499
    %v666 = vpack.c.b16 %v504, %v502
    %v667 = vpack.c.b16 %v505, %v503
    %v668 = vpack.c.b16 %v508, %v506
    %v669 = vpack.c.b16 %v509, %v507
    %v670 = vpack.c.b16 %v512, %v510
    %v671 = vpack.c.b16 %v513, %v511
    %v672 = vpack.c.b16 %v516, %v514
    %v673 = vpack.c.b16 %v517, %v515
    %v674 = vpack.c.b16 %v520, %v518
    %v675 = vpack.c.b16 %v521, %v519
    %v676 = vpack.c.b16 %v524, %v522
    %v677 = vpack.c.b16 %v525, %v523
    %v678 = vpack.c.b16 %v528, %v526
    %v679 = vpack.c.b16 %v529, %v527
    %v680 = vpack.c.b16 %v532, %v530
    %v681 = vpack.c.b16 %v533, %v531
    %v682 = vpack.c.b16 %v536, %v534
    %v683 = vpack.c.b16 %v537, %v535
    %v684 = vpack.c.b16 %v540, %v538
    %v685 = vpack.c.b16 %v541, %v539
    %v686 = vpack.c.b16 %v544, %v542
    %v687 = vpack.c.b16 %v545, %v543
    %v688 = vpack.c.b16 %v548, %v546
    %v689 = vpack.c.b16 %v549, %v547
    %v690 = vpack.c.b16 %v552, %v550
    %v691 = vpack.c.b16 %v553, %v551
    %v692 = vpack.c.b16 %v556, %v554
    %v693 = vpack.c.b16 %v557, %v555
    %v694 = vpack.c.b16 %v560, %v558
    %v695 = vpack.c.b16 %v561, %v559
    %v696 = vpack.c.b16 %v564, %v562
    %v697 = vpack.c.b16 %v565, %v563
    %v698 = vpack.c.b16 %v568, %v566
    %v699 = vpack.c.b16 %v569, %v567
    %v700 = vpack.c.b16 %v572, %v570
    %v701 = vpack.c.b16 %v573, %v571
    %830 = vmatpush.bf16.msra.mxu0 %v588
    %831 = vmatpush.bf16.msra.mxu0 %v586
    %832 = vmatpush.bf16.msra.mxu0 %v584
    %833 = vmatpush.bf16.msra.mxu0 %v582
    %834 = vmatpush.bf16.msra.mxu0 %v580
    %835 = vmatpush.bf16.msra.mxu0 %v578
    %836 = vmatpush.bf16.msra.mxu0 %v576
    %837 = vmatpush.bf16.msra.mxu0 %v574
    %838 = vmatmul.bf16.gmra.mxu0 %v174
    %v839 = vpop.f32.mrf.mxu0
    %v840 = vadd.f32 %v168, %v839
    %v841 = vpop.f32.mrf.mxu0
    %842 = vdwg.mxu0
    %843 = vmatpush.bf16.msra.mxu0 %v604
    %844 = vmatpush.bf16.msra.mxu0 %v602
    %845 = vmatpush.bf16.msra.mxu0 %v600
    %846 = vmatpush.bf16.msra.mxu0 %v598
    %847 = vmatpush.bf16.msra.mxu0 %v596
    %848 = vmatpush.bf16.msra.mxu0 %v594
    %849 = vmatpush.bf16.msra.mxu0 %v592
    %850 = vmatpush.bf16.msra.mxu0 %v590
    %851 = vmatmul.bf16.gmra.mxu0 %v175
    %v852 = vpop.f32.mrf.mxu0
    %v853 = vadd.f32 %v840, %v852
    %v854 = vpop.f32.mrf.mxu0
    %855 = vdwg.mxu0
    %856 = vmatpush.bf16.msra.mxu0 %v620
    %857 = vmatpush.bf16.msra.mxu0 %v618
    %858 = vmatpush.bf16.msra.mxu0 %v616
    %859 = vmatpush.bf16.msra.mxu0 %v614
    %860 = vmatpush.bf16.msra.mxu0 %v612
    %861 = vmatpush.bf16.msra.mxu0 %v610
    %862 = vmatpush.bf16.msra.mxu0 %v608
    %863 = vmatpush.bf16.msra.mxu0 %v606
    %864 = vmatmul.bf16.gmra.mxu0 %v176
    %v865 = vpop.f32.mrf.mxu0
    %v866 = vadd.f32 %v853, %v865
    %v867 = vpop.f32.mrf.mxu0
    %868 = vdwg.mxu0
    %869 = vmatpush.bf16.msra.mxu0 %v636
    %870 = vmatpush.bf16.msra.mxu0 %v634
    %871 = vmatpush.bf16.msra.mxu0 %v632
    %872 = vmatpush.bf16.msra.mxu0 %v630
    %873 = vmatpush.bf16.msra.mxu0 %v628
    %874 = vmatpush.bf16.msra.mxu0 %v626
    %875 = vmatpush.bf16.msra.mxu0 %v624
    %876 = vmatpush.bf16.msra.mxu0 %v622
    %877 = vmatmul.bf16.gmra.mxu0 %v177
    %v878 = vpop.f32.mrf.mxu0
    %v879 = vadd.f32 %v866, %v878
    %v880 = vpop.f32.mrf.mxu0
    %881 = vdwg.mxu0
    %882 = vmatpush.bf16.msra.mxu0 %v652
    %883 = vmatpush.bf16.msra.mxu0 %v650
    %884 = vmatpush.bf16.msra.mxu0 %v648
    %885 = vmatpush.bf16.msra.mxu0 %v646
    %886 = vmatpush.bf16.msra.mxu0 %v644
    %887 = vmatpush.bf16.msra.mxu0 %v642
    %888 = vmatpush.bf16.msra.mxu0 %v640
    %889 = vmatpush.bf16.msra.mxu0 %v638
    %890 = vmatmul.bf16.gmra.mxu0 %v178
    %v891 = vpop.f32.mrf.mxu0
    %v892 = vadd.f32 %v879, %v891
    %v893 = vpop.f32.mrf.mxu0
    %894 = vdwg.mxu0
    %895 = vmatpush.bf16.msra.mxu0 %v668
    %896 = vmatpush.bf16.msra.mxu0 %v666
    %897 = vmatpush.bf16.msra.mxu0 %v664
    %898 = vmatpush.bf16.msra.mxu0 %v662
    %899 = vmatpush.bf16.msra.mxu0 %v660
    %900 = vmatpush.bf16.msra.mxu0 %v658
    %901 = vmatpush.bf16.msra.mxu0 %v656
    %902 = vmatpush.bf16.msra.mxu0 %v654
    %903 = vmatmul.bf16.gmra.mxu0 %v179
    %v904 = vpop.f32.mrf.mxu0
    %v905 = vadd.f32 %v892, %v904
    %v906 = vpop.f32.mrf.mxu0
    %907 = vdwg.mxu0
    %908 = vmatpush.bf16.msra.mxu0 %v684
    %909 = vmatpush.bf16.msra.mxu0 %v682
    %910 = vmatpush.bf16.msra.mxu0 %v680
    %911 = vmatpush.bf16.msra.mxu0 %v678
    %912 = vmatpush.bf16.msra.mxu0 %v676
    %913 = vmatpush.bf16.msra.mxu0 %v674
    %914 = vmatpush.bf16.msra.mxu0 %v672
    %915 = vmatpush.bf16.msra.mxu0 %v670
    %916 = vmatmul.bf16.gmra.mxu0 %v180
    %v917 = vpop.f32.mrf.mxu0
    %v918 = vadd.f32 %v905, %v917
    %v919 = vpop.f32.mrf.mxu0
    %920 = vdwg.mxu0
    %921 = vmatpush.bf16.msra.mxu0 %v700
    %922 = vmatpush.bf16.msra.mxu0 %v698
    %923 = vmatpush.bf16.msra.mxu0 %v696
    %924 = vmatpush.bf16.msra.mxu0 %v694
    %925 = vmatpush.bf16.msra.mxu0 %v692
    %926 = vmatpush.bf16.msra.mxu0 %v690
    %927 = vmatpush.bf16.msra.mxu0 %v688
    %928 = vmatpush.bf16.msra.mxu0 %v686
    %929 = vmatmul.bf16.gmra.mxu0 %v181
    %v930 = vpop.f32.mrf.mxu0
    %v931 = vadd.f32 %v918, %v930
    %v932 = vpop.f32.mrf.mxu0
    %933 = vdwg.mxu0
    %934 = vmatpush.bf16.msra.mxu0 %v589
    %935 = vmatpush.bf16.msra.mxu0 %v587
    %936 = vmatpush.bf16.msra.mxu0 %v585
    %937 = vmatpush.bf16.msra.mxu0 %v583
    %938 = vmatpush.bf16.msra.mxu0 %v581
    %939 = vmatpush.bf16.msra.mxu0 %v579
    %940 = vmatpush.bf16.msra.mxu0 %v577
    %941 = vmatpush.bf16.msra.mxu0 %v575
    %942 = vmatmul.bf16.gmra.mxu0 %v174
    %v943 = vpop.f32.mrf.mxu0
    %v944 = vadd.f32 %v169, %v943
    %v945 = vpop.f32.mrf.mxu0
    %946 = vdwg.mxu0
    %947 = vmatpush.bf16.msra.mxu0 %v605
    %948 = vmatpush.bf16.msra.mxu0 %v603
    %949 = vmatpush.bf16.msra.mxu0 %v601
    %950 = vmatpush.bf16.msra.mxu0 %v599
    %951 = vmatpush.bf16.msra.mxu0 %v597
    %952 = vmatpush.bf16.msra.mxu0 %v595
    %953 = vmatpush.bf16.msra.mxu0 %v593
    %954 = vmatpush.bf16.msra.mxu0 %v591
    %955 = vmatmul.bf16.gmra.mxu0 %v175
    %v956 = vpop.f32.mrf.mxu0
    %v957 = vadd.f32 %v944, %v956
    %v958 = vpop.f32.mrf.mxu0
    %959 = vdwg.mxu0
    %960 = vmatpush.bf16.msra.mxu0 %v621
    %961 = vmatpush.bf16.msra.mxu0 %v619
    %962 = vmatpush.bf16.msra.mxu0 %v617
    %963 = vmatpush.bf16.msra.mxu0 %v615
    %964 = vmatpush.bf16.msra.mxu0 %v613
    %965 = vmatpush.bf16.msra.mxu0 %v611
    %966 = vmatpush.bf16.msra.mxu0 %v609
    %967 = vmatpush.bf16.msra.mxu0 %v607
    %968 = vmatmul.bf16.gmra.mxu0 %v176
    %v969 = vpop.f32.mrf.mxu0
    %v970 = vadd.f32 %v957, %v969
    %v971 = vpop.f32.mrf.mxu0
    %972 = vdwg.mxu0
    %973 = vmatpush.bf16.msra.mxu0 %v637
    %974 = vmatpush.bf16.msra.mxu0 %v635
    %975 = vmatpush.bf16.msra.mxu0 %v633
    %976 = vmatpush.bf16.msra.mxu0 %v631
    %977 = vmatpush.bf16.msra.mxu0 %v629
    %978 = vmatpush.bf16.msra.mxu0 %v627
    %979 = vmatpush.bf16.msra.mxu0 %v625
    %980 = vmatpush.bf16.msra.mxu0 %v623
    %981 = vmatmul.bf16.gmra.mxu0 %v177
    %v982 = vpop.f32.mrf.mxu0
    %v983 = vadd.f32 %v970, %v982
    %v984 = vpop.f32.mrf.mxu0
    %985 = vdwg.mxu0
    %986 = vmatpush.bf16.msra.mxu0 %v653
    %987 = vmatpush.bf16.msra.mxu0 %v651
    %988 = vmatpush.bf16.msra.mxu0 %v649
    %989 = vmatpush.bf16.msra.mxu0 %v647
    %990 = vmatpush.bf16.msra.mxu0 %v645
    %991 = vmatpush.bf16.msra.mxu0 %v643
    %992 = vmatpush.bf16.msra.mxu0 %v641
    %993 = vmatpush.bf16.msra.mxu0 %v639
    %994 = vmatmul.bf16.gmra.mxu0 %v178
    %v995 = vpop.f32.mrf.mxu0
    %v996 = vadd.f32 %v983, %v995
    %v997 = vpop.f32.mrf.mxu0
    %998 = vdwg.mxu0
    %999 = vmatpush.bf16.msra.mxu0 %v669
    %1000 = vmatpush.bf16.msra.mxu0 %v667
    %1001 = vmatpush.bf16.msra.mxu0 %v665
    %1002 = vmatpush.bf16.msra.mxu0 %v663
    %1003 = vmatpush.bf16.msra.mxu0 %v661
    %1004 = vmatpush.bf16.msra.mxu0 %v659
    %1005 = vmatpush.bf16.msra.mxu0 %v657
    %1006 = vmatpush.bf16.msra.mxu0 %v655
    %1007 = vmatmul.bf16.gmra.mxu0 %v179
    %v1008 = vpop.f32.mrf.mxu0
    %v1009 = vadd.f32 %v996, %v1008
    %v1010 = vpop.f32.mrf.mxu0
    %1011 = vdwg.mxu0
    %1012 = vmatpush.bf16.msra.mxu0 %v685
    %1013 = vmatpush.bf16.msra.mxu0 %v683
    %1014 = vmatpush.bf16.msra.mxu0 %v681
    %1015 = vmatpush.bf16.msra.mxu0 %v679
    %1016 = vmatpush.bf16.msra.mxu0 %v677
    %1017 = vmatpush.bf16.msra.mxu0 %v675
    %1018 = vmatpush.bf16.msra.mxu0 %v673
    %1019 = vmatpush.bf16.msra.mxu0 %v671
    %1020 = vmatmul.bf16.gmra.mxu0 %v180
    %v1021 = vpop.f32.mrf.mxu0
    %v1022 = vadd.f32 %v1009, %v1021
    %v1023 = vpop.f32.mrf.mxu0
    %1024 = vdwg.mxu0
    %1025 = vmatpush.bf16.msra.mxu0 %v701
    %1026 = vmatpush.bf16.msra.mxu0 %v699
    %1027 = vmatpush.bf16.msra.mxu0 %v697
    %1028 = vmatpush.bf16.msra.mxu0 %v695
    %1029 = vmatpush.bf16.msra.mxu0 %v693
    %1030 = vmatpush.bf16.msra.mxu0 %v691
    %1031 = vmatpush.bf16.msra.mxu0 %v689
    %1032 = vmatpush.bf16.msra.mxu0 %v687
    %1033 = vmatmul.bf16.gmra.mxu0 %v181
    %v1034 = vpop.f32.mrf.mxu0
    %v1035 = vadd.f32 %v1022, %v1034
    %v1036 = vpop.f32.mrf.mxu0
    %1037 = vdwg.mxu0
    %v1038 = vmax.f32 %v931, 0.0
    %v1039 = vmax.f32 %v1035, 0.0
    %v1040 = vld [vmem:[%s3] sm:$0xff]
    %v1041 = vld [vmem:[%s3 + $0x8] sm:$0xff]
    %v1042 = vld [vmem:[%s3 + $0x10] sm:$0xff]
    %v1043 = vld [vmem:[%s3 + $0x18] sm:$0xff]
    %v1044 = vld [vmem:[%s3 + $0x20] sm:$0xff]
    %v1045 = vld [vmem:[%s3 + $0x28] sm:$0xff]
    %v1046 = vld [vmem:[%s3 + $0x30] sm:$0xff]
    %v1047 = vld [vmem:[%s3 + $0x38] sm:$0xff]
    %v1048 = vld [vmem:[%s3 + $0x40] sm:$0xff]
    %v1049 = vld [vmem:[%s3 + $0x48] sm:$0xff]
    %v1050 = vld [vmem:[%s3 + $0x50] sm:$0xff]
    %v1051 = vld [vmem:[%s3 + $0x58] sm:$0xff]
    %v1052 = vld [vmem:[%s3 + $0x60] sm:$0xff]
    %v1053 = vld [vmem:[%s3 + $0x68] sm:$0xff]
    %v1054 = vld [vmem:[%s3 + $0x70] sm:$0xff]
    %v1055 = vld [vmem:[%s3 + $0x78] sm:$0xff]
    %v1056 = vld [vmem:[%s3 + $0x80] sm:$0xff]
    %v1057 = vld [vmem:[%s3 + $0x88] sm:$0xff]
    %v1058 = vld [vmem:[%s3 + $0x90] sm:$0xff]
    %v1059 = vld [vmem:[%s3 + $0x98] sm:$0xff]
    %v1060 = vld [vmem:[%s3 + $0xa0] sm:$0xff]
    %v1061 = vld [vmem:[%s3 + $0xa8] sm:$0xff]
    %v1062 = vld [vmem:[%s3 + $0xb0] sm:$0xff]
    %v1063 = vld [vmem:[%s3 + $0xb8] sm:$0xff]
    %v1064 = vld [vmem:[%s3 + $0xc0] sm:$0xff]
    %v1065 = vld [vmem:[%s3 + $0xc8] sm:$0xff]
    %v1066 = vld [vmem:[%s3 + $0xd0] sm:$0xff]
    %v1067 = vld [vmem:[%s3 + $0xd8] sm:$0xff]
    %v1068 = vld [vmem:[%s3 + $0xe0] sm:$0xff]
    %v1069 = vld [vmem:[%s3 + $0xe8] sm:$0xff]
    %v1070 = vld [vmem:[%s3 + $0xf0] sm:$0xff]
    %v1071 = vld [vmem:[%s3 + $0xf8] sm:$0xff]
    %v1072 = vld [vmem:[%s4] sm:$0x1]
    %v1074 = vperm.slane %v1072, 0
    %1076 = vmatpush.msra.mxu0 %v1055
    %1077 = vmatpush.msra.mxu0 %v1054
    %1078 = vmatpush.msra.mxu0 %v1053
    %1079 = vmatpush.msra.mxu0 %v1052
    %1080 = vmatpush.msra.mxu0 %v1051
    %1081 = vmatpush.msra.mxu0 %v1050
    %1082 = vmatpush.msra.mxu0 %v1049
    %1083 = vmatpush.msra.mxu0 %v1048
    %1084 = vmatpush.msra.mxu0 %v1047
    %1085 = vmatpush.msra.mxu0 %v1046
    %1086 = vmatpush.msra.mxu0 %v1045
    %1087 = vmatpush.msra.mxu0 %v1044
    %1088 = vmatpush.msra.mxu0 %v1043
    %1089 = vmatpush.msra.mxu0 %v1042
    %1090 = vmatpush.msra.mxu0 %v1041
    %1091 = vmatpush.msra.mxu0 %v1040
    %1092 = vmatmul.f32.gmra.mxu0 %v1038
    %v1093 = vpop.f32.mrf.mxu0
    %v1094 = vadd.f32 %v1074, %v1093
    %1095 = vdwg.mxu0
    %1096 = vmatpush.msra.mxu0 %v1071
    %1097 = vmatpush.msra.mxu0 %v1070
    %1098 = vmatpush.msra.mxu0 %v1069
    %1099 = vmatpush.msra.mxu0 %v1068
    %1100 = vmatpush.msra.mxu0 %v1067
    %1101 = vmatpush.msra.mxu0 %v1066
    %1102 = vmatpush.msra.mxu0 %v1065
    %1103 = vmatpush.msra.mxu0 %v1064
    %1104 = vmatpush.msra.mxu0 %v1063
    %1105 = vmatpush.msra.mxu0 %v1062
    %1106 = vmatpush.msra.mxu0 %v1061
    %1107 = vmatpush.msra.mxu0 %v1060
    %1108 = vmatpush.msra.mxu0 %v1059
    %1109 = vmatpush.msra.mxu0 %v1058
    %1110 = vmatpush.msra.mxu0 %v1057
    %1111 = vmatpush.msra.mxu0 %v1056
    %1112 = vmatmul.f32.gmra.mxu0 %v1039
    %v1113 = vpop.f32.mrf.mxu0
    %v1114 = vadd.f32 %v1094, %v1113
    %1115 = vdwg.mxu0
    %vm1116 = vcmask 58368
    %v1117 = vsel %vm1116, %v1114, -inf
    %1118 = vmax.xlane.f32.xlu0 %v1117
    %v1119 = vpop.xlane.xlu0 %1118
    %v1120 = vsub.f32 %v1114, %v1119
    %v1121 = vmul.f32 %v1120, 1.442695
    %v1122 = vpow.pop %v1121
    %v1123 = vsel %vm1116, %v1122, 0.0
    %1124 = vadd.xlane.f32.xlu0 %v1123
    %v1125 = vpop.xlane.xlu0 %1124
    %v1126 = vrcp.pop %v1125
    %v1127 = vmul.f32 %v1122, %v1126
    %1128 = vst.msk [vmem:[#allocation5] sm:$0x3] %vm1116, %v1127
    // Predicated region
    $region26: #{tpu_custom_call.1} parent=1 // pred_check
      _
    $region27: #{tpu_custom_call.1} parent=1 // pred_check_branch
      %1130 = sbr.rel (0) target = $region29
    $region28: #{tpu_custom_call.1} parent=1 // pred_region
      %1132 = vsyncadd [#allocation4], 0
      %s1134 = sshll.u32 [#allocation5], 4
      %s1135 = int_to_ptr.vmem [resolvable:$true] %s1134
      %s1136 = sshll.u32 %s5, 4
      %s1137 = int_to_ptr.hbm [resolvable:$true] %s1136
      %1139 = dma.vmem_to_hbm [thread:$0]  %s1135, 32, %s1137, [#allocation4]
    $region29: #{tpu_custom_call.1} parent=1 // pred_fallthru
      _
    // Predicated region
    $region30: #{tpu_custom_call.1} parent=1 // pred_check
      _
    $region31: #{tpu_custom_call.1} parent=1 // pred_check_branch
      %1141 = sbr.rel (0) target = $region33
    $region32: #{tpu_custom_call.1} parent=1 // pred_region
      %1143 = dma.done [#allocation4], 32
    $region33: #{tpu_custom_call.1} parent=1 // pred_fallthru
      _
    %1144 = vsyncpa [#allocation3], 1
    %1145 = vsyncpa [#allocation4], 1

</llo_original>
